<compile_context>
chip_gen: v7x
topology: tpu7x:2x2x1
jax: 0.10.0
libtpu: 0.0.40
codegen_flags: <defaults>
</compile_context>

<pallas_src>
import jax
import jax.numpy as jnp
from jax.experimental import pallas as pl
from jax.experimental.pallas import tpu as pltpu


def _sender_kernel(x_ref, w_ref, b_ref, o_ref):
    # x_ref: [TB, F], w_ref: [F, TH] (pre-transposed), b_ref: [1, TH]
    y = jnp.dot(x_ref[...], w_ref[...], preferred_element_type=jnp.float32)
    y = y + b_ref[...]                              # VPU broadcast add (f32)
    o_ref[...] = jnp.tanh(y).astype(o_ref.dtype)    # EUP tanh


def _round_up(x, m):
    return ((x + m - 1) // m) * m


# Working-set budget: fits the default scoped VMEM limit on v5e/v6e (32 MiB
# of 128 MiB) and v7x (32 MiB of 64 MiB) without needing vmem_limit_bytes.
_VMEM_BUDGET = 24 * 1024 * 1024
_W_RESIDENT_LIMIT = 16 * 1024 * 1024   # keep W VMEM-resident below this


def sender_forward(x, weight, bias, *, compute_dtype=jnp.float32,
                   out_dtype=jnp.float32):
    """Sender forward: tanh(x @ weight.T + bias).

    x:      [B, F]  float32
    weight: [H, F]  float32 (PyTorch nn.Linear layout)
    bias:   [H]     float32
    compute_dtype: dtype fed to the MXU (f32/bf16); accumulation is always f32.
    out_dtype:     output dtype (bf16 halves output HBM traffic if acceptable).
    """
    B, F = x.shape
    H = weight.shape[0]
    in_item = jnp.dtype(compute_dtype).itemsize
    out_item = jnp.dtype(out_dtype).itemsize
    # bf16 packs 2 rows per sublane -> keep batch tiles a multiple of 16.
    row_mult = 16 if in_item < 4 else 8

    # One-time parameter prep (folded by XLA; not per-step work).
    w_t = weight.T.astype(compute_dtype)          # [F, H], MXU-native RHS
    b2d = bias.reshape(1, H).astype(jnp.float32)  # bias added in f32
    x_c = x.astype(compute_dtype)

    w_bytes = 2 * F * H * in_item                 # double-buffered residency

    if w_bytes <= _W_RESIDENT_LIMIT:
        # ---- 1-D grid over batch tiles; weight + bias stay VMEM-resident ----
        TB = min(1024, _round_up(B, row_mult))
        # v7x has 2 TensorCores: keep >= 2 blocks on the "parallel" batch axis
        # whenever the batch allows it (harmless on v5e/v6e).
        if pl.cdiv(B, TB) == 1 and B > row_mult:
            TB = _round_up(pl.cdiv(B, 2), row_mult)

        def working_set(tb):
            return (2 * tb * F * in_item          # x tile, double-buffered
                    + 2 * tb * H * out_item       # out tile, double-buffered
                    + w_bytes + 2 * H * 4)        # resident W + bias

        while working_set(TB) > _VMEM_BUDGET and TB > row_mult:
            TB = _round_up(max(TB // 2, row_mult), row_mult)

        return pl.pallas_call(
            _sender_kernel,
            out_shape=jax.ShapeDtypeStruct((B, H), out_dtype),
            grid=(pl.cdiv(B, TB),),
            in_specs=[
                pl.BlockSpec((TB, F), lambda i: (i, 0)),   # x: batch-tiled
                pl.BlockSpec((F, H), lambda i: (0, 0)),    # W: resident
                pl.BlockSpec((1, H), lambda i: (0, 0)),    # bias: resident
            ],
            out_specs=pl.BlockSpec((TB, H), lambda i: (i, 0)),
            compiler_params=pltpu.CompilerParams(
                dimension_semantics=("parallel",)),
        )(x_c, w_t, b2d)

    # ---- 2-D fallback for very large H: tile the hidden dim ----
    H128 = _round_up(H, 128)
    TH = next(c for c in (512, 256, 128) if H128 % c == 0)
    H_pad = H128
    if H_pad != H:
        w_t = jnp.pad(w_t, ((0, 0), (0, H_pad - H)))
        b2d = jnp.pad(b2d, ((0, 0), (0, H_pad - H)))

    TB = min(512, _round_up(B, row_mult))

    def working_set2(tb):
        return (2 * tb * F * in_item + 2 * tb * TH * out_item
                + 2 * F * TH * in_item + 2 * TH * 4)

    while working_set2(TB) > _VMEM_BUDGET and TB > row_mult:
        TB = _round_up(max(TB // 2, row_mult), row_mult)

    out = pl.pallas_call(
        _sender_kernel,
        out_shape=jax.ShapeDtypeStruct((B, H_pad), out_dtype),
        grid=(pl.cdiv(B, TB), H_pad // TH),
        in_specs=[
            pl.BlockSpec((TB, F), lambda i, j: (i, 0)),
            pl.BlockSpec((F, TH), lambda i, j: (0, j)),
            pl.BlockSpec((1, TH), lambda i, j: (0, j)),
        ],
        out_specs=pl.BlockSpec((TB, TH), lambda i, j: (i, j)),
        compiler_params=pltpu.CompilerParams(
            dimension_semantics=("parallel", "parallel")),
    )(x_c, w_t, b2d)
    return out[:, :H] if H_pad != H else out


if __name__ == "__main__":
    # Shapes consistent with Sender(n_features, n_hidden).
    B, n_features, n_hidden = 384, 32, 32

    key = jax.random.PRNGKey(0)
    kx, kw, kb = jax.random.split(key, 3)

    # PyTorch nn.Linear layout: weight [n_hidden, n_features], bias [n_hidden]
    x = jax.random.normal(kx, (B, n_features), dtype=jnp.float32)
    weight = jax.random.normal(kw, (n_hidden, n_features), dtype=jnp.float32) * 0.1
    bias = jax.random.normal(kb, (n_hidden,), dtype=jnp.float32) * 0.1

    ref = jnp.tanh(x @ weight.T + bias)

    # f32 path (even batch tiling): strict check
    out = jax.block_until_ready(sender_forward(x, weight, bias))
    assert out.shape == (B, n_hidden)
    assert jnp.allclose(out, ref, atol=1e-5, rtol=1e-5)

    # Ragged final batch block (Pallas drops out-of-bounds writes)
    out_r = jax.block_until_ready(sender_forward(x[:100], weight, bias))
    assert out_r.shape == (100, n_hidden)
    assert jnp.allclose(out_r, ref[:100], atol=1e-5, rtol=1e-5)

    # bf16 MXU-feed path (f32 accumulation): loose check
    out_bf16 = jax.block_until_ready(
        sender_forward(x, weight, bias, compute_dtype=jnp.bfloat16))
    assert out_bf16.shape == (B, n_hidden)
    assert jnp.allclose(out_bf16, ref, atol=3e-2, rtol=3e-2)

    print("KERNEL_OK")
</pallas_src>

<mosaic_0001>
module attributes {stable_mosaic.version = 11 : i64} {
  func.func @_sender_kernel(%arg0: i32, %arg1: memref<192x32xf32, #tpu.memory_space<vmem>>, %arg2: memref<32x32xf32, #tpu.memory_space<vmem>>, %arg3: memref<1x32xf32, #tpu.memory_space<vmem>>, %arg4: memref<192x32xf32, #tpu.memory_space<vmem>>) attributes {dimension_semantics = [#tpu.dimension_semantics<parallel>], iteration_bounds = array<i64: 2>, scalar_prefetch = 0 : i64, scratch_operands = 0 : i64, tpu.core_type = #tpu.core_type<tc>, window_params = [{transform_indices = @transform_0, window_bounds = array<i64: 192, 32>}, {pipeline_mode = #tpu.pipeline_mode<synchronous>, transform_indices = @transform_1, window_bounds = array<i64: 32, 32>}, {pipeline_mode = #tpu.pipeline_mode<synchronous>, transform_indices = @transform_2, window_bounds = array<i64: 1, 32>}, {transform_indices = @transform_3, window_bounds = array<i64: 192, 32>}]} {
    %c0 = arith.constant 0 : index
    %c0_0 = arith.constant 0 : index
    %0 = vector.load %arg1[%c0, %c0_0] : memref<192x32xf32, #tpu.memory_space<vmem>>, vector<192x32xf32>
    %c0_1 = arith.constant 0 : index
    %c0_2 = arith.constant 0 : index
    %1 = vector.load %arg2[%c0_1, %c0_2] : memref<32x32xf32, #tpu.memory_space<vmem>>, vector<32x32xf32>
    %cst = arith.constant dense<0.000000e+00> : vector<192x32xf32>
    %2 = tpu.matmul %0, %1, %cst {dimension_numbers = #tpu.dot_dimension_numbers<[1], [0], [0], [1], [0, 0, 1, 1], [], []>} : vector<192x32xf32>, vector<32x32xf32>, vector<192x32xf32> -> vector<192x32xf32>
    %c0_3 = arith.constant 0 : index
    %c0_4 = arith.constant 0 : index
    %3 = vector.load %arg3[%c0_3, %c0_4] : memref<1x32xf32, #tpu.memory_space<vmem>>, vector<1x32xf32>
    %4 = vector.broadcast %3 : vector<1x32xf32> to vector<192x32xf32>
    %5 = arith.addf %2, %4 : vector<192x32xf32>
    %6 = math.tanh %5 : vector<192x32xf32>
    %c0_5 = arith.constant 0 : index
    %c0_6 = arith.constant 0 : index
    %7 = vector.load %arg4[%c0_5, %c0_6] : memref<192x32xf32, #tpu.memory_space<vmem>>, vector<192x32xf32>
    tpu.vector_store %arg4[%c0_5, %c0_6], %6 {strides = array<i32>} : memref<192x32xf32, #tpu.memory_space<vmem>>, vector<192x32xf32>,
    return
  }
  func.func @transform_0(%arg0: i32) -> (i32, i32) {
    %c0_i32 = arith.constant 0 : i32
    %c0_i32_0 = arith.constant 0 : i32
    return %arg0, %c0_i32 : i32, i32
  }
  func.func @transform_1(%arg0: i32) -> (i32, i32) {
    %c0_i32 = arith.constant 0 : i32
    %c0_i32_0 = arith.constant 0 : i32
    %c0_i32_1 = arith.constant 0 : i32
    return %c0_i32, %c0_i32_0 : i32, i32
  }
  func.func @transform_2(%arg0: i32) -> (i32, i32) {
    %c0_i32 = arith.constant 0 : i32
    %c0_i32_0 = arith.constant 0 : i32
    %c0_i32_1 = arith.constant 0 : i32
    return %c0_i32, %c0_i32_0 : i32, i32
  }
  func.func @transform_3(%arg0: i32) -> (i32, i32) {
    %c0_i32 = arith.constant 0 : i32
    %c0_i32_0 = arith.constant 0 : i32
    return %arg0, %c0_i32 : i32, i32
  }
}

</mosaic_0001>

<llo_original>
// kernel: tpu_custom_call.1
$region0: #{tpu_custom_call.1}
  #allocation0 [shape = 'u32[]', space=smem, size = 0x4, offset = 0x4, fixed_abs, tag = 'smem constant byte address 0x4 - core index']
  #allocation1 [shape = 'u32[144,128]{1,0:T(1,128)}', space=vmem, size = 0x12000, scoped, tag = 'internal scratch']
  %s0 = inlined_call_operand.vmem [shape: f32[384,32], index: 0, kind: input, shape index: {}]
  %s1 = inlined_call_operand.vmem [shape: f32[32,32], index: 1, kind: input, shape index: {}]
  %s2 = inlined_call_operand.vmem [shape: f32[1,32], index: 2, kind: input, shape index: {}]
  %s3 = inlined_call_operand.vmem [shape: f32[384,32], index: 3, kind: output, shape index: {}]
  %s4 = sld [smem:[#allocation0]]
  $region45: #{tpu_custom_call.1} parent=0
    _
  %s6 = ssub.s32 1, %s4
  %s7 = scalar_select 0, %s6, %s4
  loop: start=0, step=1, limit=4
  $region2: #{tpu_custom_call.1} parent=0 // loop_pre_header
    _
  $region3: #{tpu_custom_call.1} parent=0 // loop_header
    %s9 = sphi 0, %s13
    %p10 = scmp.ge.s32.totalorder %s9, 4
    %s19 = sphi 0, %s21
    %s22 = sphi 0, %s19
    %s23 = sphi 0, %s22
    %s39 = sphi 0, %s23
    %s43 = sphi 0, %s43
    %s45 = sphi 0, %s43
    %s46 = sphi 0, %s45
    %s60 = sphi 0, %s46
    %s64 = sphi 0, %s64
    %s66 = sphi 0, %s64
    %s67 = sphi 0, %s66
    %s81 = sphi 0, %s67
    %s87 = sphi 0, %s89
    %s90 = sphi 0, %s87
    %s91 = sphi 0, %s90
    %s107 = sphi 0, %s91
  $region4: #{tpu_custom_call.1} parent=0 // loop_header_branch
    %12 = sbr.rel (%p10) target = $region8
  $region5: #{tpu_custom_call.1} parent=0 // loop_body
    %s14 = ssub.s32 %s9, 1
    %s15 = ssub.s32 %s9, 2
    %s16 = sadd.s32 %s9, 1
    %s17 = ssub.s32 %s9, %s16
    %p18 = scmp.eq.s32.totalorder %s17, 0
    %s20 = sadd.s32 %s19, 1
    %s21 = scalar_select %p18, %s19, %s20
    %p24 = pneg %p18
    %p25 = scmp.eq.s32.totalorder %s9, 1
    %p26 = por %p24, %p25
    %p27 = scmp.ne.s32.totalorder %s19, %s22
    %p28 = scmp.eq.s32.totalorder %s9, 0
    %p29 = por %p27, %p28
    %p30 = scmp.ne.s32.totalorder %s19, %s22
    %p31 = scmp.eq.s32.totalorder %s14, 1
    %p32 = por %p30, %p31
    %p33 = scmp.ne.s32.totalorder %s22, %s23
    %p34 = scmp.eq.s32.totalorder %s14, 0
    %p35 = por %p33, %p34
    %p36 = scmp.ne.s32.totalorder %s22, %s23
    %p37 = scmp.eq.s32.totalorder %s15, 1
    %p38 = por %p36, %p37
    %p40 = scmp.ne.s32.totalorder %s23, %s39
    %p41 = scmp.eq.s32.totalorder %s15, 0
    %p42 = por %p40, %p41
    %s44 = sadd.s32 %s43, 1
    %p47 = scmp.eq.s32.totalorder %s9, 1
    %p48 = scmp.ne.s32.totalorder %s43, %s45
    %p49 = scmp.eq.s32.totalorder %s9, 0
    %p50 = por %p48, %p49
    %p51 = scmp.ne.s32.totalorder %s43, %s45
    %p52 = scmp.eq.s32.totalorder %s14, 1
    %p53 = por %p51, %p52
    %p54 = scmp.ne.s32.totalorder %s45, %s46
    %p55 = scmp.eq.s32.totalorder %s14, 0
    %p56 = por %p54, %p55
    %p57 = scmp.ne.s32.totalorder %s45, %s46
    %p58 = scmp.eq.s32.totalorder %s15, 1
    %p59 = por %p57, %p58
    %p61 = scmp.ne.s32.totalorder %s46, %s60
    %p62 = scmp.eq.s32.totalorder %s15, 0
    %p63 = por %p61, %p62
    %s65 = sadd.s32 %s64, 1
    %p68 = scmp.eq.s32.totalorder %s9, 1
    %p69 = scmp.ne.s32.totalorder %s64, %s66
    %p70 = scmp.eq.s32.totalorder %s9, 0
    %p71 = por %p69, %p70
    %p72 = scmp.ne.s32.totalorder %s64, %s66
    %p73 = scmp.eq.s32.totalorder %s14, 1
    %p74 = por %p72, %p73
    %p75 = scmp.ne.s32.totalorder %s66, %s67
    %p76 = scmp.eq.s32.totalorder %s14, 0
    %p77 = por %p75, %p76
    %p78 = scmp.ne.s32.totalorder %s66, %s67
    %p79 = scmp.eq.s32.totalorder %s15, 1
    %p80 = por %p78, %p79
    %p82 = scmp.ne.s32.totalorder %s67, %s81
    %p83 = scmp.eq.s32.totalorder %s15, 0
    %p84 = por %p82, %p83
    %s85 = ssub.s32 %s9, %s16
    %p86 = scmp.eq.s32.totalorder %s85, 0
    %s88 = sadd.s32 %s87, 1
    %s89 = scalar_select %p86, %s87, %s88
    %p92 = pneg %p86
    %p93 = scmp.eq.s32.totalorder %s9, 1
    %p94 = por %p92, %p93
    %p95 = scmp.ne.s32.totalorder %s87, %s90
    %p96 = scmp.eq.s32.totalorder %s9, 0
    %p97 = por %p95, %p96
    %p98 = scmp.ne.s32.totalorder %s87, %s90
    %p99 = scmp.eq.s32.totalorder %s14, 1
    %p100 = por %p98, %p99
    %p101 = scmp.ne.s32.totalorder %s90, %s91
    %p102 = scmp.eq.s32.totalorder %s14, 0
    %p103 = por %p101, %p102
    %p104 = scmp.ne.s32.totalorder %s90, %s91
    %p105 = scmp.eq.s32.totalorder %s15, 1
    %p106 = por %p104, %p105
    %p108 = scmp.ne.s32.totalorder %s91, %s107
    %p109 = scmp.eq.s32.totalorder %s15, 0
    %p110 = por %p108, %p109
    %p111 = scmp.le.s32.totalorder 1, %s9
    %p112 = scmp.lt.s32.totalorder %s9, 3
    %p113 = pnand %p111, %p112
    %p114 = pneg %p113
    // Predicated region
    $region9: #{tpu_custom_call.1} parent=5 // pred_check
      _
    $region10: #{tpu_custom_call.1} parent=5 // pred_check_branch
      %116 = sbr.rel (%p113) target = $region12
    $region11: #{tpu_custom_call.1} parent=5 // pred_region
      %s117 = ssub.s32 %s9, 1
      // Predicated region
      $region13: #{tpu_custom_call.1} parent=11 // pred_check
        %p118 = pneg %p56
      $region14: #{tpu_custom_call.1} parent=11 // pred_check_branch
        %120 = sbr.rel (%p118) target = $region16
      $region15: #{tpu_custom_call.1} parent=11 // pred_region
        _
      $region16: #{tpu_custom_call.1} parent=11 // pred_fallthru
        _
      // Predicated region
      $region17: #{tpu_custom_call.1} parent=11 // pred_check
        %p121 = pneg %p77
      $region18: #{tpu_custom_call.1} parent=11 // pred_check_branch
        %123 = sbr.rel (%p121) target = $region20
      $region19: #{tpu_custom_call.1} parent=11 // pred_region
        _
      $region20: #{tpu_custom_call.1} parent=11 // pred_fallthru
        _
    $region12: #{tpu_custom_call.1} parent=5 // pred_fallthru
      _
    %p124 = scmp.lt.s32.totalorder %s9, 2
    // Predicated region
    $region21: #{tpu_custom_call.1} parent=5 // pred_check
      %p125 = pneg %p124
    $region22: #{tpu_custom_call.1} parent=5 // pred_check_branch
      %127 = sbr.rel (%p125) target = $region24
    $region23: #{tpu_custom_call.1} parent=5 // pred_region
      // Predicated region
      $region25: #{tpu_custom_call.1} parent=23 // pred_check
        %p128 = pneg %p29
      $region26: #{tpu_custom_call.1} parent=23 // pred_check_branch
        %130 = sbr.rel (%p128) target = $region28
      $region27: #{tpu_custom_call.1} parent=23 // pred_region
        %s131 = smul.u32 24, %s9
        %p132 = scmp.lt.s32.totalorder %s131, 47
        %s133 = scalar_select %p132, %s131, 47
        %s134 = smul.addr %s133, 8
        %s135 = scalar_lea.vmem %s0, %s134
        %s136 = smul.u32 24, %s9
      $region28: #{tpu_custom_call.1} parent=23 // pred_fallthru
        _
    $region24: #{tpu_custom_call.1} parent=5 // pred_fallthru
      _
    %p137 = scmp.le.s32.totalorder 1, %s9
    %p138 = scmp.lt.s32.totalorder %s9, 3
    %p139 = pnand %p137, %p138
    %p140 = pneg %p139
    // Predicated region
    $region29: #{tpu_custom_call.1} parent=5 // pred_check
      _
    $region30: #{tpu_custom_call.1} parent=5 // pred_check_branch
      %142 = sbr.rel (%p139) target = $region32
    $region31: #{tpu_custom_call.1} parent=5 // pred_region
      %s143 = ssub.s32 %s9, 1
      %s144 = smul.u32 24, %s14
      %p145 = scmp.lt.s32.totalorder %s144, 47
      %s146 = scalar_select %p145, %s144, 47
      %s147 = smul.addr %s146, 8
      %s148 = scalar_lea.vmem %s0, %s147
      %p149 = pneg %p35
      %p150 = pneg %p32
      %p151 = pneg %p56
      %p152 = pneg %p53
      %p153 = pneg %p77
      %p154 = pneg %p74
      %p155 = pneg %p103
      %p156 = pneg %p100
      %s157 = smul.u32 24, %s14
      %p158 = scmp.lt.s32.totalorder %s157, 47
      %s159 = scalar_select %p158, %s157, 47
      %s160 = smul.addr %s159, 8
      %s161 = scalar_lea.vmem %s3, %s160
      %s162 = smul.u32 24, %s14
      %p163 = scmp.lt.s32.totalorder %s162, 47
      %s164 = scalar_select %p163, %s162, 47
      %s165 = smul.addr %s164, 8
      %s166 = scalar_lea.vmem %s0, %s165
      %s167 = smul.u32 24, %s14
      %s168 = smul.u32 24, %s14
      %p169 = scmp.lt.s32.totalorder %s168, 47
      %s170 = scalar_select %p169, %s168, 47
      %s171 = smul.addr %s170, 8
      %s172 = scalar_lea.vmem %s3, %s171
      %s173 = smul.u32 24, %s14
      %v174 = vld [vmem:[%s166] sm:$0xff]
      %v175 = vld [vmem:[%s166 + $0x8] sm:$0xff]
      %v176 = vld [vmem:[%s166 + $0x10] sm:$0xff]
      %v177 = vld [vmem:[%s166 + $0x18] sm:$0xff]
      %v178 = vld [vmem:[%s166 + $0x20] sm:$0xff]
      %v179 = vld [vmem:[%s166 + $0x28] sm:$0xff]
      %v180 = vld [vmem:[%s166 + $0x30] sm:$0xff]
      %v181 = vld [vmem:[%s166 + $0x38] sm:$0xff]
      %v182 = vld [vmem:[%s166 + $0x40] sm:$0xff]
      %v183 = vld [vmem:[%s166 + $0x48] sm:$0xff]
      %v184 = vld [vmem:[%s166 + $0x50] sm:$0xff]
      %v185 = vld [vmem:[%s166 + $0x58] sm:$0xff]
      %v186 = vld [vmem:[%s166 + $0x60] sm:$0xff]
      %v187 = vld [vmem:[%s166 + $0x68] sm:$0xff]
      %v188 = vld [vmem:[%s166 + $0x70] sm:$0xff]
      %v189 = vld [vmem:[%s166 + $0x78] sm:$0xff]
      %v190 = vld [vmem:[%s166 + $0x80] sm:$0xff]
      %v191 = vld [vmem:[%s166 + $0x88] sm:$0xff]
      %v192 = vld [vmem:[%s166 + $0x90] sm:$0xff]
      %v193 = vld [vmem:[%s166 + $0x98] sm:$0xff]
      %v194 = vld [vmem:[%s166 + $0xa0] sm:$0xff]
      %v195 = vld [vmem:[%s166 + $0xa8] sm:$0xff]
      %v196 = vld [vmem:[%s166 + $0xb0] sm:$0xff]
      %v197 = vld [vmem:[%s166 + $0xb8] sm:$0xff]
      %v198 = vld [vmem:[%s1] sm:$0xff]
      %v199 = vld [vmem:[%s1 + $0x8] sm:$0xff]
      %v200 = vld [vmem:[%s1 + $0x10] sm:$0xff]
      %v201 = vld [vmem:[%s1 + $0x18] sm:$0xff]
      %v202 = vld [vmem:[%s2] sm:$0x1]
      %v204 = vlaneseq
      %v205 = vshrl.u32 %v204, 7
      %v206 = vsub.s32 0, %v205
      %v207 = vrot.slane %v202, %v206
      %vm209 = vcmask 261120
      %v211 = vsel %vm209, %v174, 0
      %v214 = vsel %vm209, %v175, 0
      %v217 = vsel %vm209, %v176, 0
      %v220 = vsel %vm209, %v177, 0
      %v223 = vsel %vm209, %v178, 0
      %v226 = vsel %vm209, %v179, 0
      %v229 = vsel %vm209, %v180, 0
      %v232 = vsel %vm209, %v181, 0
      %v235 = vsel %vm209, %v182, 0
      %v238 = vsel %vm209, %v183, 0
      %v241 = vsel %vm209, %v184, 0
      %v244 = vsel %vm209, %v185, 0
      %v247 = vsel %vm209, %v186, 0
      %v250 = vsel %vm209, %v187, 0
      %v253 = vsel %vm209, %v188, 0
      %v256 = vsel %vm209, %v189, 0
      %v259 = vsel %vm209, %v190, 0
      %v262 = vsel %vm209, %v191, 0
      %v265 = vsel %vm209, %v192, 0
      %v268 = vsel %vm209, %v193, 0
      %v271 = vsel %vm209, %v194, 0
      %v274 = vsel %vm209, %v195, 0
      %v277 = vsel %vm209, %v196, 0
      %v280 = vsel %vm209, %v197, 0
      %282 = vmatprep.subr.mxu0 0.0
      %283 = vmatpush1.msra.mxu0 %v198
      %284 = vmatprep.subr.mxu0 0.0
      %285 = vmatpush1.msra.mxu0 %v199
      %286 = vmatprep.subr.mxu0 0.0
      %287 = vmatpush1.msra.mxu0 %v200
      %288 = vmatprep.subr.mxu0 0.0
      %289 = vmatpush1.msra.mxu0 %v201
      %290 = vmatprep.subr.mxu0 0.0
      %291 = vmatpush1.msra.mxu0 0.0
      %292 = vmatprep.subr.mxu0 0.0
      %293 = vmatpush1.msra.mxu0 0.0
      %294 = vmatprep.subr.mxu0 0.0
      %295 = vmatpush1.msra.mxu0 0.0
      %296 = vmatprep.subr.mxu0 0.0
      %297 = vmatpush1.msra.mxu0 0.0
      %298 = vmatprep.subr.mxu0 0.0
      %299 = vmatpush1.msra.mxu0 0.0
      %300 = vmatprep.subr.mxu0 0.0
      %301 = vmatpush1.msra.mxu0 0.0
      %302 = vmatprep.subr.mxu0 0.0
      %303 = vmatpush1.msra.mxu0 0.0
      %304 = vmatprep.subr.mxu0 0.0
      %305 = vmatpush1.msra.mxu0 0.0
      %306 = vmatprep.subr.mxu0 0.0
      %307 = vmatpush1.msra.mxu0 0.0
      %308 = vmatprep.subr.mxu0 0.0
      %309 = vmatpush1.msra.mxu0 0.0
      %310 = vmatprep.subr.mxu0 0.0
      %311 = vmatpush1.msra.mxu0 0.0
      %312 = vmatprep.subr.mxu0 0.0
      %313 = vmatpush1.msra.mxu0 0.0
      %314 = vmatprep.subr.mxu0 0.0
      %315 = vmatpush1.msra.mxu0 0.0
      %316 = vmatprep.subr.mxu0 0.0
      %317 = vmatpush1.msra.mxu0 0.0
      %318 = vmatprep.subr.mxu0 0.0
      %319 = vmatpush1.msra.mxu0 0.0
      %320 = vmatprep.subr.mxu0 0.0
      %321 = vmatpush1.msra.mxu0 0.0
      %322 = vmatprep.subr.mxu0 0.0
      %323 = vmatpush1.msra.mxu0 0.0
      %324 = vmatprep.subr.mxu0 0.0
      %325 = vmatpush1.msra.mxu0 0.0
      %326 = vmatprep.subr.mxu0 0.0
      %327 = vmatpush1.msra.mxu0 0.0
      %328 = vmatprep.subr.mxu0 0.0
      %329 = vmatpush1.msra.mxu0 0.0
      %330 = vmatprep.subr.mxu0 0.0
      %331 = vmatpush1.msra.mxu0 0.0
      %332 = vmatprep.subr.mxu0 0.0
      %333 = vmatpush1.msra.mxu0 0.0
      %334 = vmatprep.subr.mxu0 0.0
      %335 = vmatpush1.msra.mxu0 0.0
      %336 = vmatprep.subr.mxu0 0.0
      %337 = vmatpush1.msra.mxu0 0.0
      %338 = vmatprep.subr.mxu0 0.0
      %339 = vmatpush1.msra.mxu0 0.0
      %340 = vmatprep.subr.mxu0 0.0
      %341 = vmatpush1.msra.mxu0 0.0
      %342 = vmatprep.subr.mxu0 0.0
      %343 = vmatpush1.msra.mxu0 0.0
      %344 = vmatprep.subr.mxu0 0.0
      %345 = vmatpush1.msra.mxu0 0.0
      %346 = vmatprep.mubr.f32.mxu0 0.0
      %347 = vmatmul.mubr.f32.gmra.mrb[0].mxu0 %v211
      %v348 = vpop.f32.mrb[0].mxu0
      %v349 = vadd.f32 %v207, %v348
      %v350 = vpop.f32.mrb[0].mxu0
      %351 = vmatprep.mubr.f32.mxu0 0.0
      %352 = vmatmul.mubr.f32.gmra.mrb[0].mxu0 %v214
      %v353 = vpop.f32.mrb[0].mxu0
      %v354 = vadd.f32 %v207, %v353
      %v355 = vpop.f32.mrb[0].mxu0
      %356 = vmatprep.mubr.f32.mxu0 0.0
      %357 = vmatmul.mubr.f32.gmra.mrb[0].mxu0 %v217
      %v358 = vpop.f32.mrb[0].mxu0
      %v359 = vadd.f32 %v207, %v358
      %v360 = vpop.f32.mrb[0].mxu0
      %361 = vmatprep.mubr.f32.mxu0 0.0
      %362 = vmatmul.mubr.f32.gmra.mrb[0].mxu0 %v220
      %v363 = vpop.f32.mrb[0].mxu0
      %v364 = vadd.f32 %v207, %v363
      %v365 = vpop.f32.mrb[0].mxu0
      %366 = vmatprep.mubr.f32.mxu0 0.0
      %367 = vmatmul.mubr.f32.gmra.mrb[0].mxu0 %v223
      %v368 = vpop.f32.mrb[0].mxu0
      %v369 = vadd.f32 %v207, %v368
      %v370 = vpop.f32.mrb[0].mxu0
      %371 = vmatprep.mubr.f32.mxu0 0.0
      %372 = vmatmul.mubr.f32.gmra.mrb[0].mxu0 %v226
      %v373 = vpop.f32.mrb[0].mxu0
      %v374 = vadd.f32 %v207, %v373
      %v375 = vpop.f32.mrb[0].mxu0
      %376 = vmatprep.mubr.f32.mxu0 0.0
      %377 = vmatmul.mubr.f32.gmra.mrb[0].mxu0 %v229
      %v378 = vpop.f32.mrb[0].mxu0
      %v379 = vadd.f32 %v207, %v378
      %v380 = vpop.f32.mrb[0].mxu0
      %381 = vmatprep.mubr.f32.mxu0 0.0
      %382 = vmatmul.mubr.f32.gmra.mrb[0].mxu0 %v232
      %v383 = vpop.f32.mrb[0].mxu0
      %v384 = vadd.f32 %v207, %v383
      %v385 = vpop.f32.mrb[0].mxu0
      %386 = vmatprep.mubr.f32.mxu0 0.0
      %387 = vmatmul.mubr.f32.gmra.mrb[0].mxu0 %v235
      %v388 = vpop.f32.mrb[0].mxu0
      %v389 = vadd.f32 %v207, %v388
      %v390 = vpop.f32.mrb[0].mxu0
      %391 = vmatprep.mubr.f32.mxu0 0.0
      %392 = vmatmul.mubr.f32.gmra.mrb[0].mxu0 %v238
      %v393 = vpop.f32.mrb[0].mxu0
      %v394 = vadd.f32 %v207, %v393
      %v395 = vpop.f32.mrb[0].mxu0
      %396 = vmatprep.mubr.f32.mxu0 0.0
      %397 = vmatmul.mubr.f32.gmra.mrb[0].mxu0 %v241
      %v398 = vpop.f32.mrb[0].mxu0
      %v399 = vadd.f32 %v207, %v398
      %v400 = vpop.f32.mrb[0].mxu0
      %401 = vmatprep.mubr.f32.mxu0 0.0
      %402 = vmatmul.mubr.f32.gmra.mrb[0].mxu0 %v244
      %v403 = vpop.f32.mrb[0].mxu0
      %v404 = vadd.f32 %v207, %v403
      %v405 = vpop.f32.mrb[0].mxu0
      %406 = vmatprep.mubr.f32.mxu0 0.0
      %407 = vmatmul.mubr.f32.gmra.mrb[0].mxu0 %v247
      %v408 = vpop.f32.mrb[0].mxu0
      %v409 = vadd.f32 %v207, %v408
      %v410 = vpop.f32.mrb[0].mxu0
      %411 = vmatprep.mubr.f32.mxu0 0.0
      %412 = vmatmul.mubr.f32.gmra.mrb[0].mxu0 %v250
      %v413 = vpop.f32.mrb[0].mxu0
      %v414 = vadd.f32 %v207, %v413
      %v415 = vpop.f32.mrb[0].mxu0
      %416 = vmatprep.mubr.f32.mxu0 0.0
      %417 = vmatmul.mubr.f32.gmra.mrb[0].mxu0 %v253
      %v418 = vpop.f32.mrb[0].mxu0
      %v419 = vadd.f32 %v207, %v418
      %v420 = vpop.f32.mrb[0].mxu0
      %421 = vmatprep.mubr.f32.mxu0 0.0
      %422 = vmatmul.mubr.f32.gmra.mrb[0].mxu0 %v256
      %v423 = vpop.f32.mrb[0].mxu0
      %v424 = vadd.f32 %v207, %v423
      %v425 = vpop.f32.mrb[0].mxu0
      %426 = vmatprep.mubr.f32.mxu0 0.0
      %427 = vmatmul.mubr.f32.gmra.mrb[0].mxu0 %v259
      %v428 = vpop.f32.mrb[0].mxu0
      %v429 = vadd.f32 %v207, %v428
      %v430 = vpop.f32.mrb[0].mxu0
      %431 = vmatprep.mubr.f32.mxu0 0.0
      %432 = vmatmul.mubr.f32.gmra.mrb[0].mxu0 %v262
      %v433 = vpop.f32.mrb[0].mxu0
      %v434 = vadd.f32 %v207, %v433
      %v435 = vpop.f32.mrb[0].mxu0
      %436 = vmatprep.mubr.f32.mxu0 0.0
      %437 = vmatmul.mubr.f32.gmra.mrb[0].mxu0 %v265
      %v438 = vpop.f32.mrb[0].mxu0
      %v439 = vadd.f32 %v207, %v438
      %v440 = vpop.f32.mrb[0].mxu0
      %441 = vmatprep.mubr.f32.mxu0 0.0
      %442 = vmatmul.mubr.f32.gmra.mrb[0].mxu0 %v268
      %v443 = vpop.f32.mrb[0].mxu0
      %v444 = vadd.f32 %v207, %v443
      %v445 = vpop.f32.mrb[0].mxu0
      %446 = vmatprep.mubr.f32.mxu0 0.0
      %447 = vmatmul.mubr.f32.gmra.mrb[0].mxu0 %v271
      %v448 = vpop.f32.mrb[0].mxu0
      %v449 = vadd.f32 %v207, %v448
      %v450 = vpop.f32.mrb[0].mxu0
      %451 = vmatprep.mubr.f32.mxu0 0.0
      %452 = vmatmul.mubr.f32.gmra.mrb[0].mxu0 %v274
      %v453 = vpop.f32.mrb[0].mxu0
      %v454 = vadd.f32 %v207, %v453
      %v455 = vpop.f32.mrb[0].mxu0
      %456 = vmatprep.mubr.f32.mxu0 0.0
      %457 = vmatmul.mubr.f32.gmra.mrb[0].mxu0 %v277
      %v458 = vpop.f32.mrb[0].mxu0
      %v459 = vadd.f32 %v207, %v458
      %v460 = vpop.f32.mrb[0].mxu0
      %461 = vmatprep.mubr.f32.mxu0 0.0
      %462 = vmatmul.mubr.f32.gmra.mrb[0].mxu0 %v280
      %v463 = vpop.f32.mrb[0].mxu0
      %v464 = vadd.f32 %v207, %v463
      %v465 = vpop.f32.mrb[0].mxu0
      %466 = vdwg.mxu0
      %v467 = vtanh.pop %v349
      %v468 = vtanh.pop %v354
      %v469 = vtanh.pop %v359
      %v470 = vtanh.pop %v364
      %v471 = vtanh.pop %v369
      %v472 = vtanh.pop %v374
      %v473 = vtanh.pop %v379
      %v474 = vtanh.pop %v384
      %v475 = vtanh.pop %v389
      %v476 = vtanh.pop %v394
      %v477 = vtanh.pop %v399
      %v478 = vtanh.pop %v404
      %v479 = vtanh.pop %v409
      %v480 = vtanh.pop %v414
      %v481 = vtanh.pop %v419
      %v482 = vtanh.pop %v424
      %v483 = vtanh.pop %v429
      %v484 = vtanh.pop %v434
      %v485 = vtanh.pop %v439
      %v486 = vtanh.pop %v444
      %v487 = vtanh.pop %v449
      %v488 = vtanh.pop %v454
      %v489 = vtanh.pop %v459
      %v490 = vtanh.pop %v464
      %491 = vst.msk [vmem:[%s172] sm:$0xff] %vm209, %v467
      %492 = vst.msk [vmem:[%s172 + $0x8] sm:$0xff] %vm209, %v468
      %493 = vst.msk [vmem:[%s172 + $0x10] sm:$0xff] %vm209, %v469
      %494 = vst.msk [vmem:[%s172 + $0x18] sm:$0xff] %vm209, %v470
      %495 = vst.msk [vmem:[%s172 + $0x20] sm:$0xff] %vm209, %v471
      %496 = vst.msk [vmem:[%s172 + $0x28] sm:$0xff] %vm209, %v472
      %497 = vst.msk [vmem:[%s172 + $0x30] sm:$0xff] %vm209, %v473
      %498 = vst.msk [vmem:[%s172 + $0x38] sm:$0xff] %vm209, %v474
      %499 = vst.msk [vmem:[%s172 + $0x40] sm:$0xff] %vm209, %v475
      %500 = vst.msk [vmem:[%s172 + $0x48] sm:$0xff] %vm209, %v476
      %501 = vst.msk [vmem:[%s172 + $0x50] sm:$0xff] %vm209, %v477
      %502 = vst.msk [vmem:[%s172 + $0x58] sm:$0xff] %vm209, %v478
      %503 = vst.msk [vmem:[%s172 + $0x60] sm:$0xff] %vm209, %v479
      %504 = vst.msk [vmem:[%s172 + $0x68] sm:$0xff] %vm209, %v480
      %505 = vst.msk [vmem:[%s172 + $0x70] sm:$0xff] %vm209, %v481
      %506 = vst.msk [vmem:[%s172 + $0x78] sm:$0xff] %vm209, %v482
      %507 = vst.msk [vmem:[%s172 + $0x80] sm:$0xff] %vm209, %v483
      %508 = vst.msk [vmem:[%s172 + $0x88] sm:$0xff] %vm209, %v484
      %509 = vst.msk [vmem:[%s172 + $0x90] sm:$0xff] %vm209, %v485
      %510 = vst.msk [vmem:[%s172 + $0x98] sm:$0xff] %vm209, %v486
      %511 = vst.msk [vmem:[%s172 + $0xa0] sm:$0xff] %vm209, %v487
      %512 = vst.msk [vmem:[%s172 + $0xa8] sm:$0xff] %vm209, %v488
      %513 = vst.msk [vmem:[%s172 + $0xb0] sm:$0xff] %vm209, %v489
      %514 = vst.msk [vmem:[%s172 + $0xb8] sm:$0xff] %vm209, %v490
      %s515 = smul.u32 24, %s14
      %p516 = scmp.lt.s32.totalorder %s515, 47
      %s517 = scalar_select %p516, %s515, 47
      %s518 = smul.addr %s517, 8
      %s519 = scalar_lea.vmem %s3, %s518
      // Predicated region
      $region33: #{tpu_custom_call.1} parent=31 // pred_check
        %p520 = pneg %p100
      $region34: #{tpu_custom_call.1} parent=31 // pred_check_branch
        %522 = sbr.rel (%p520) target = $region36
      $region35: #{tpu_custom_call.1} parent=31 // pred_region
        %s523 = smul.u32 24, %s14
      $region36: #{tpu_custom_call.1} parent=31 // pred_fallthru
        _
    $region32: #{tpu_custom_call.1} parent=5 // pred_fallthru
      _
    %p524 = scmp.le.s32.totalorder 2, %s9
    // Predicated region
    $region37: #{tpu_custom_call.1} parent=5 // pred_check
      %p525 = pneg %p524
    $region38: #{tpu_custom_call.1} parent=5 // pred_check_branch
      %527 = sbr.rel (%p525) target = $region40
    $region39: #{tpu_custom_call.1} parent=5 // pred_region
      %s528 = ssub.s32 %s9, 2
      // Predicated region
      $region41: #{tpu_custom_call.1} parent=39 // pred_check
        %p529 = pneg %p106
      $region42: #{tpu_custom_call.1} parent=39 // pred_check_branch
        %531 = sbr.rel (%p529) target = $region44
      $region43: #{tpu_custom_call.1} parent=39 // pred_region
        %s532 = smul.u32 24, %s15
        %p533 = scmp.lt.s32.totalorder %s532, 47
        %s534 = scalar_select %p533, %s532, 47
        %s535 = smul.addr %s534, 8
        %s536 = scalar_lea.vmem %s3, %s535
      $region44: #{tpu_custom_call.1} parent=39 // pred_fallthru
        _
    $region40: #{tpu_custom_call.1} parent=5 // pred_fallthru
      _
  $region6: #{tpu_custom_call.1} parent=0 // loop_footer
    %s13 = sadd.s32 1, %s9
  $region7: #{tpu_custom_call.1} parent=0 // loop_footer_branch
    %8 = sbr.rel target = $region3
  $region8: #{tpu_custom_call.1} parent=0 // loop_exit
    _

</llo_original>
